<compile_context>
chip_gen: v7x
topology: tpu7x:2x2x1
jax: 0.10.0
libtpu: 0.0.40
codegen_flags: <defaults>
</compile_context>

<pallas_src>
from functools import partial

import jax
import jax.numpy as jnp
from jax.experimental import pallas as pl
from jax.experimental.pallas import tpu as pltpu


def _residual_kernel(patches_ref, wcomb_ref, params_ref, out_ref, *,
                     nhw, cout, eps):
    # patches_ref : (K*K*Cin, N*H*W) f32  -- im2col, lanes = flattened (n,h,w)
    # wcomb_ref   : (2*Cout, K*K*Cin) f32 -- rows [0:Cout]   = conv weight
    #                                        rows [Cout:2C]  = shortcut weight
    #                                        (zero outside center-tap columns)
    # params_ref  : (Cout, 3)        f32  -- [:,0]=gamma [:,1]=beta [:,2]=b_sc
    # out_ref     : (Cout, N*H*W)    f32  -- lane-dense output slab

    # ---- conv3x3 + shortcut 1x1 as ONE MXU matmul ----
    both = jnp.dot(wcomb_ref[...], patches_ref[...],
                   preferred_element_type=jnp.float32)        # (2*Cout, NHW)
    acc = both[:cout, :]                                      # conv output
    sc = both[cout:, :]                                       # shortcut (no bias yet)

    # ---- BatchNorm2d (training-mode batch stats, biased variance) ----
    inv_n = 1.0 / nhw
    mean = jnp.sum(acc, axis=1, keepdims=True) * inv_n        # (Cout, 1)
    msq = jnp.sum(acc * acc, axis=1, keepdims=True) * inv_n   # (Cout, 1)
    var = msq - mean * mean
    inv = jax.lax.rsqrt(var + eps)                            # EUP

    gamma = params_ref[:, 0:1]                                # (Cout, 1)
    beta = params_ref[:, 1:2]
    b_sc = params_ref[:, 2:3]
    scale = gamma * inv
    shift = beta - mean * scale

    # ---- BN + ReLU (fused affine) + residual add ----
    relu = jnp.maximum(acc * scale + shift, 0.0)              # (Cout, NHW)
    out_ref[...] = (sc + b_sc) + relu


def residual_layer_fwd(x_nchw, w_conv, gamma, beta, w_sc, b_sc, eps=1e-5):
    """x_nchw: (N, Cin, H, W); w_conv: (K, K, Cin, Cout); w_sc: (Cin, Cout)."""
    N, Cin, H, W = x_nchw.shape
    K = w_conv.shape[0]
    Cout = w_conv.shape[-1]
    pad = (K - 1) // 2
    nhw = N * H * W

    x = x_nchw.astype(jnp.float32)
    x_pad = jnp.pad(x, ((0, 0), (0, 0), (pad, pad), (pad, pad)))

    # im2col (wrapper-side layout plumbing):
    #   patches[(kh*K + kw)*Cin + c, n*H*W + h*W + w] = x_pad[n, c, h+kh, w+kw]
    taps = [x_pad[:, :, kh:kh + H, kw:kw + W]
            for kh in range(K) for kw in range(K)]             # (N,Cin,H,W) each
    patches = jnp.stack(taps, axis=0)                          # (KK,N,Cin,H,W)
    patches = jnp.transpose(patches, (0, 2, 1, 3, 4))          # (KK,Cin,N,H,W)
    patches = patches.reshape(K * K * Cin, nhw)                # (KKC, NHW)

    # conv weight as (Cout, K*K*Cin); row order matches the im2col rows.
    w2 = w_conv.astype(jnp.float32).reshape(K * K * Cin, Cout).T   # (Cout, KKC)
    # shortcut weight zero-embedded into the center-tap columns so both convs
    # share a single contraction.
    center_row = (pad * K + pad) * Cin
    wsc2 = w_sc.astype(jnp.float32).T                              # (Cout, Cin)
    wsc_full = jnp.zeros((Cout, K * K * Cin), jnp.float32)
    wsc_full = wsc_full.at[:, center_row:center_row + Cin].set(wsc2)
    w_comb = jnp.concatenate([w2, wsc_full], axis=0)               # (2*Cout, KKC)

    params = jnp.stack([gamma, beta, b_sc], axis=1).astype(jnp.float32)  # (Cout,3)

    kernel = partial(_residual_kernel, nhw=nhw, cout=Cout, eps=eps)
    vmem = pl.BlockSpec(memory_space=pltpu.MemorySpace.VMEM)

    # Whole problem (~100 KiB of VMEM) in one invocation; BatchNorm needs the
    # full batch resident to compute batch statistics.
    out = pl.pallas_call(
        kernel,
        out_shape=jax.ShapeDtypeStruct((Cout, nhw), jnp.float32),
        in_specs=[vmem, vmem, vmem],
        out_specs=vmem,
    )(patches, w_comb, params)

    # (Cout, N*H*W) -> (N, Cout, H, W)
    return jnp.transpose(out.reshape(Cout, N, H, W), (1, 0, 2, 3))


def residual_layer_ref(x_nchw, w_conv, gamma, beta, w_sc, b_sc, eps=1e-5):
    """Pure-JAX reference (same semantics as the PyTorch forward, train mode)."""
    w_oihw = jnp.transpose(w_conv, (3, 2, 0, 1))                   # (Cout,Cin,K,K)
    conv = jax.lax.conv_general_dilated(
        x_nchw, w_oihw, (1, 1), 'SAME',
        dimension_numbers=('NCHW', 'OIHW', 'NCHW'))
    mean = conv.mean(axis=(0, 2, 3), keepdims=True)
    var = ((conv - mean) ** 2).mean(axis=(0, 2, 3), keepdims=True)
    bn = (conv - mean) * jax.lax.rsqrt(var + eps) \
         * gamma[None, :, None, None] + beta[None, :, None, None]
    relu = jnp.maximum(bn, 0.0)
    w_sc_oihw = jnp.transpose(w_sc, (1, 0))[:, :, None, None]      # (Cout,Cin,1,1)
    sc = jax.lax.conv_general_dilated(
        x_nchw, w_sc_oihw, (1, 1), 'VALID',
        dimension_numbers=('NCHW', 'OIHW', 'NCHW')) + b_sc[None, :, None, None]
    return sc + relu


if __name__ == "__main__":
    # Small shapes consistent with the module: in_dim=4, out_dim=8 (so the
    # 1x1-conv shortcut path is exercised), k=3, with_bn=True.
    N, Cin, Cout, H, W, K = 2, 4, 8, 16, 16, 3

    key = jax.random.PRNGKey(0)
    kx, kw, kg, kb, kws, kbs = jax.random.split(key, 6)

    x = jax.random.normal(kx, (N, Cin, H, W), dtype=jnp.float32)
    w_conv = jax.random.normal(kw, (K, K, Cin, Cout), dtype=jnp.float32) * 0.1
    gamma = 1.0 + 0.1 * jax.random.normal(kg, (Cout,), dtype=jnp.float32)
    beta = 0.1 * jax.random.normal(kb, (Cout,), dtype=jnp.float32)
    w_sc = jax.random.normal(kws, (Cin, Cout), dtype=jnp.float32) * 0.1
    b_sc = 0.1 * jax.random.normal(kbs, (Cout,), dtype=jnp.float32)

    out = residual_layer_fwd(x, w_conv, gamma, beta, w_sc, b_sc)
    out = jax.block_until_ready(out)

    ref = residual_layer_ref(x, w_conv, gamma, beta, w_sc, b_sc)
    ref = jax.block_until_ready(ref)

    assert out.shape == (N, Cout, H, W), out.shape
    assert jnp.allclose(out, ref, rtol=1e-4, atol=1e-4), \
        float(jnp.max(jnp.abs(out - ref)))
    print("KERNEL_OK")
</pallas_src>

<mosaic_0001>
module attributes {stable_mosaic.version = 11 : i64} {
  func.func @_residual_kernel(%arg0: memref<36x512xf32, #tpu.memory_space<vmem>>, %arg1: memref<16x36xf32, #tpu.memory_space<vmem>>, %arg2: memref<8x3xf32, #tpu.memory_space<vmem>>, %arg3: memref<8x512xf32, #tpu.memory_space<vmem>>) attributes {dimension_semantics = [], scalar_prefetch = 0 : i64, scratch_operands = 0 : i64, tpu.core_type = #tpu.core_type<tc>} {
    %c0 = arith.constant 0 : index
    %c0_0 = arith.constant 0 : index
    %0 = vector.load %arg1[%c0, %c0_0] : memref<16x36xf32, #tpu.memory_space<vmem>>, vector<16x36xf32>
    %c0_1 = arith.constant 0 : index
    %c0_2 = arith.constant 0 : index
    %1 = vector.load %arg0[%c0_1, %c0_2] : memref<36x512xf32, #tpu.memory_space<vmem>>, vector<36x512xf32>
    %cst = arith.constant dense<0.000000e+00> : vector<16x512xf32>
    %2 = tpu.matmul %0, %1, %cst {dimension_numbers = #tpu.dot_dimension_numbers<[1], [0], [0], [1], [0, 0, 1, 1], [], []>} : vector<16x36xf32>, vector<36x512xf32>, vector<16x512xf32> -> vector<16x512xf32>
    %3 = vector.extract_strided_slice %2 {offsets = [0, 0], sizes = [8, 512], strides = [1, 1]} : vector<16x512xf32> to vector<8x512xf32>
    %4 = vector.extract_strided_slice %2 {offsets = [8, 0], sizes = [8, 512], strides = [1, 1]} : vector<16x512xf32> to vector<8x512xf32>
    %cst_3 = arith.constant dense<0.000000e+00> : vector<8xf32>
    %5 = vector.multi_reduction <add>, %3, %cst_3 [1] : vector<8x512xf32> to vector<8xf32>
    %6 = vector.shape_cast %5 : vector<8xf32> to vector<8x1xf32>
    %cst_4 = arith.constant 0.001953125 : f32
    %7 = vector.broadcast %cst_4 : f32 to vector<8x1xf32>
    %8 = arith.mulf %6, %7 : vector<8x1xf32>
    %9 = arith.mulf %3, %3 : vector<8x512xf32>
    %cst_5 = arith.constant dense<0.000000e+00> : vector<8xf32>
    %10 = vector.multi_reduction <add>, %9, %cst_5 [1] : vector<8x512xf32> to vector<8xf32>
    %11 = vector.shape_cast %10 : vector<8xf32> to vector<8x1xf32>
    %cst_6 = arith.constant 0.001953125 : f32
    %12 = vector.broadcast %cst_6 : f32 to vector<8x1xf32>
    %13 = arith.mulf %11, %12 : vector<8x1xf32>
    %14 = arith.mulf %8, %8 : vector<8x1xf32>
    %15 = arith.subf %13, %14 : vector<8x1xf32>
    %cst_7 = arith.constant 9.99999974E-6 : f32
    %16 = vector.broadcast %cst_7 : f32 to vector<8x1xf32>
    %17 = arith.addf %15, %16 : vector<8x1xf32>
    %18 = math.rsqrt %17 : vector<8x1xf32>
    %c0_8 = arith.constant 0 : index
    %c0_9 = arith.constant 0 : index
    %19 = vector.load %arg2[%c0_8, %c0_9] : memref<8x3xf32, #tpu.memory_space<vmem>>, vector<8x1xf32>
    %c0_10 = arith.constant 0 : index
    %c1 = arith.constant 1 : index
    %20 = vector.load %arg2[%c0_10, %c1] : memref<8x3xf32, #tpu.memory_space<vmem>>, vector<8x1xf32>
    %c0_11 = arith.constant 0 : index
    %c2 = arith.constant 2 : index
    %21 = vector.load %arg2[%c0_11, %c2] : memref<8x3xf32, #tpu.memory_space<vmem>>, vector<8x1xf32>
    %22 = arith.mulf %19, %18 : vector<8x1xf32>
    %23 = arith.mulf %8, %22 : vector<8x1xf32>
    %24 = arith.subf %20, %23 : vector<8x1xf32>
    %25 = vector.broadcast %22 : vector<8x1xf32> to vector<8x512xf32>
    %26 = arith.mulf %3, %25 : vector<8x512xf32>
    %27 = vector.broadcast %24 : vector<8x1xf32> to vector<8x512xf32>
    %28 = arith.addf %26, %27 : vector<8x512xf32>
    %cst_12 = arith.constant 0.000000e+00 : f32
    %29 = vector.broadcast %cst_12 : f32 to vector<8x512xf32>
    %30 = arith.maximumf %28, %29 : vector<8x512xf32>
    %31 = vector.broadcast %21 : vector<8x1xf32> to vector<8x512xf32>
    %32 = arith.addf %4, %31 : vector<8x512xf32>
    %33 = arith.addf %32, %30 : vector<8x512xf32>
    %c0_13 = arith.constant 0 : index
    %c0_14 = arith.constant 0 : index
    %34 = vector.load %arg3[%c0_13, %c0_14] : memref<8x512xf32, #tpu.memory_space<vmem>>, vector<8x512xf32>
    tpu.vector_store %arg3[%c0_13, %c0_14], %33 {strides = array<i32>} : memref<8x512xf32, #tpu.memory_space<vmem>>, vector<8x512xf32>,
    return
  }
}

</mosaic_0001>

<llo_original>
// kernel: tpu_custom_call.1
$region0: #{tpu_custom_call.1}
  #allocation0 [shape = 'u32[]', space=smem, size = 0x4, offset = 0x4, fixed_abs, tag = 'smem constant byte address 0x4 - core index']
  #allocation1 [shape = 'u32[144,128]{1,0:T(1,128)}', space=vmem, size = 0x12000, scoped, tag = 'internal scratch']
  %s0 = inlined_call_operand.hbm [shape: f32[36,512], index: 0, kind: input, shape index: {}]
  %s1 = inlined_call_operand.hbm [shape: f32[16,36], index: 1, kind: input, shape index: {}]
  %s2 = inlined_call_operand.vmem [shape: f32[8,3], index: 2, kind: input, shape index: {}]
  %s3 = inlined_call_operand.hbm [shape: f32[8,512], index: 3, kind: output, shape index: {}]
  %s4 = sld [smem:[#allocation0]]
  $region30: #{tpu_custom_call.1} parent=0
    _
  %s6 = ssub.s32 1, %s4
  %s7 = scalar_select 0, %s6, %s4
  $region1: #{tpu_custom_call.1} parent=0
    #allocation2 [shape = 'u8[81920]{0}', space=vmem, size = 0x14000, scoped, tag = 'input window, operand 0, single buffered']
    #allocation3 [shape = 's32[1]{0}', space=sflag, size = 0x4, scoped, tag = 'scoped memory for tpu_custom_call.1']
    #allocation4 [shape = 's32[1]{0}', space=sflag, size = 0x4, scoped, tag = 'scoped memory for tpu_custom_call.1']
    #allocation5 [shape = 'u8[8192]{0}', space=vmem, size = 0x2000, scoped, tag = 'input window, operand 1, single buffered']
    #allocation6 [shape = 's32[1]{0}', space=sflag, size = 0x4, scoped, tag = 'scoped memory for tpu_custom_call.1']
    #allocation7 [shape = 'u8[16384]{0}', space=vmem, size = 0x4000, scoped, tag = 'output window, operand 0, single buffered']
    %8 = vsyncpa [#allocation3], 0
    %9 = vsyncpa [#allocation6], 0
    %10 = vsyncpa [#allocation4], 0
    // Predicated region
    $region2: #{tpu_custom_call.1} parent=1 // pred_check
      _
    $region3: #{tpu_custom_call.1} parent=1 // pred_check_branch
      %12 = sbr.rel (0) target = $region5
    $region4: #{tpu_custom_call.1} parent=1 // pred_region
      %s14 = ssub.s32 2560, 2560
      %15 = vsyncadd [#allocation3], %s14
      %s16 = sshll.u32 [#allocation2], 4
      %s17 = int_to_ptr.vmem [resolvable:$true] %s16
      %22 = dma.hbm_to_vmem [thread:$0]  %s0, 2560, %s17, [#allocation3], 512, 512, 32
    $region5: #{tpu_custom_call.1} parent=1 // pred_fallthru
      _
    // Predicated region
    $region6: #{tpu_custom_call.1} parent=1 // pred_check
      _
    $region7: #{tpu_custom_call.1} parent=1 // pred_check_branch
      %24 = sbr.rel (0) target = $region9
    $region8: #{tpu_custom_call.1} parent=1 // pred_region
      %s26 = ssub.s32 256, 256
      %27 = vsyncadd [#allocation6], %s26
      %s28 = sshll.u32 [#allocation5], 4
      %s29 = int_to_ptr.vmem [resolvable:$true] %s28
      %34 = dma.hbm_to_vmem [thread:$0]  %s1, 256, %s29, [#allocation6], 128, 128, 8
    $region9: #{tpu_custom_call.1} parent=1 // pred_fallthru
      _
    // Predicated region
    $region10: #{tpu_custom_call.1} parent=1 // pred_check
      _
    $region11: #{tpu_custom_call.1} parent=1 // pred_check_branch
      %36 = sbr.rel (0) target = $region13
    $region12: #{tpu_custom_call.1} parent=1 // pred_region
      _
    $region13: #{tpu_custom_call.1} parent=1 // pred_fallthru
      _
    // Predicated region
    $region14: #{tpu_custom_call.1} parent=1 // pred_check
      _
    $region15: #{tpu_custom_call.1} parent=1 // pred_check_branch
      %38 = sbr.rel (0) target = $region17
    $region16: #{tpu_custom_call.1} parent=1 // pred_region
      %39 = dma.done [#allocation3], 2560
    $region17: #{tpu_custom_call.1} parent=1 // pred_fallthru
      _
    // Predicated region
    $region18: #{tpu_custom_call.1} parent=1 // pred_check
      _
    $region19: #{tpu_custom_call.1} parent=1 // pred_check_branch
      %41 = sbr.rel (0) target = $region21
    $region20: #{tpu_custom_call.1} parent=1 // pred_region
      %42 = dma.done [#allocation6], 256
    $region21: #{tpu_custom_call.1} parent=1 // pred_fallthru
      _
    %v43 = vld [vmem:[#allocation5] sm:$0xff]
    %v44 = vld [vmem:[#allocation5 + $0x8] sm:$0xff]
    %v45 = vld [vmem:[#allocation2] sm:$0xff]
    %v46 = vld [vmem:[#allocation2 + $0x8] sm:$0xff]
    %v47 = vld [vmem:[#allocation2 + $0x10] sm:$0xff]
    %v48 = vld [vmem:[#allocation2 + $0x18] sm:$0xff]
    %v49 = vld [vmem:[#allocation2 + $0x20] sm:$0xff]
    %v50 = vld [vmem:[#allocation2 + $0x28] sm:$0xff]
    %v51 = vld [vmem:[#allocation2 + $0x30] sm:$0xff]
    %v52 = vld [vmem:[#allocation2 + $0x38] sm:$0xff]
    %v53 = vld [vmem:[#allocation2 + $0x40] sm:$0xff]
    %v54 = vld [vmem:[#allocation2 + $0x48] sm:$0xff]
    %v55 = vld [vmem:[#allocation2 + $0x50] sm:$0xff]
    %v56 = vld [vmem:[#allocation2 + $0x58] sm:$0xff]
    %v57 = vld [vmem:[#allocation2 + $0x60] sm:$0xff]
    %v58 = vld [vmem:[#allocation2 + $0x68] sm:$0xff]
    %v59 = vld [vmem:[#allocation2 + $0x70] sm:$0xff]
    %v60 = vld [vmem:[#allocation2 + $0x78] sm:$0xff]
    %v61 = vld [vmem:[#allocation2 + $0x80] sm:$0xf]
    %v62 = vld [vmem:[#allocation2 + $0x88] sm:$0xf]
    %v63 = vld [vmem:[#allocation2 + $0x90] sm:$0xf]
    %v64 = vld [vmem:[#allocation2 + $0x98] sm:$0xf]
    %vm65 = vcmask 293888
    %v67 = vsel %vm65, %v43, 0
    %v70 = vsel %vm65, %v44, 0
    %vm72 = vcmask 1043456
    %v74 = vsel %vm72, %v61, 0
    %v77 = vsel %vm72, %v62, 0
    %v80 = vsel %vm72, %v63, 0
    %v83 = vsel %vm72, %v64, 0
    %85 = vmatprep.subr.mxu0 %v46
    %86 = vmatpush1.msra.mxu0 %v45
    %87 = vmatprep.subr.mxu0 %v50
    %88 = vmatpush1.msra.mxu0 %v49
    %89 = vmatprep.subr.mxu0 %v54
    %90 = vmatpush1.msra.mxu0 %v53
    %91 = vmatprep.subr.mxu0 %v58
    %92 = vmatpush1.msra.mxu0 %v57
    %93 = vmatprep.subr.mxu0 %v77
    %94 = vmatpush1.msra.mxu0 %v74
    %95 = vmatprep.subr.mxu0 0.0
    %96 = vmatpush1.msra.mxu0 0.0
    %97 = vmatprep.subr.mxu0 0.0
    %98 = vmatpush1.msra.mxu0 0.0
    %99 = vmatprep.subr.mxu0 0.0
    %100 = vmatpush1.msra.mxu0 0.0
    %101 = vmatprep.subr.mxu0 0.0
    %102 = vmatpush1.msra.mxu0 0.0
    %103 = vmatprep.subr.mxu0 0.0
    %104 = vmatpush1.msra.mxu0 0.0
    %105 = vmatprep.subr.mxu0 0.0
    %106 = vmatpush1.msra.mxu0 0.0
    %107 = vmatprep.subr.mxu0 0.0
    %108 = vmatpush1.msra.mxu0 0.0
    %109 = vmatprep.subr.mxu0 0.0
    %110 = vmatpush1.msra.mxu0 0.0
    %111 = vmatprep.subr.mxu0 0.0
    %112 = vmatpush1.msra.mxu0 0.0
    %113 = vmatprep.subr.mxu0 0.0
    %114 = vmatpush1.msra.mxu0 0.0
    %115 = vmatprep.subr.mxu0 0.0
    %116 = vmatpush1.msra.mxu0 0.0
    %117 = vmatprep.subr.mxu0 0.0
    %118 = vmatpush1.msra.mxu0 0.0
    %119 = vmatprep.subr.mxu0 0.0
    %120 = vmatpush1.msra.mxu0 0.0
    %121 = vmatprep.subr.mxu0 0.0
    %122 = vmatpush1.msra.mxu0 0.0
    %123 = vmatprep.subr.mxu0 0.0
    %124 = vmatpush1.msra.mxu0 0.0
    %125 = vmatprep.subr.mxu0 0.0
    %126 = vmatpush1.msra.mxu0 0.0
    %127 = vmatprep.subr.mxu0 0.0
    %128 = vmatpush1.msra.mxu0 0.0
    %129 = vmatprep.subr.mxu0 0.0
    %130 = vmatpush1.msra.mxu0 0.0
    %131 = vmatprep.subr.mxu0 0.0
    %132 = vmatpush1.msra.mxu0 0.0
    %133 = vmatprep.subr.mxu0 0.0
    %134 = vmatpush1.msra.mxu0 0.0
    %135 = vmatprep.subr.mxu0 0.0
    %136 = vmatpush1.msra.mxu0 0.0
    %137 = vmatprep.subr.mxu0 0.0
    %138 = vmatpush1.msra.mxu0 0.0
    %139 = vmatprep.subr.mxu0 0.0
    %140 = vmatpush1.msra.mxu0 0.0
    %141 = vmatprep.subr.mxu0 0.0
    %142 = vmatpush1.msra.mxu0 0.0
    %143 = vmatprep.subr.mxu0 0.0
    %144 = vmatpush1.msra.mxu0 0.0
    %145 = vmatprep.subr.mxu0 0.0
    %146 = vmatpush1.msra.mxu0 0.0
    %147 = vmatprep.subr.mxu0 0.0
    %148 = vmatpush1.msra.mxu0 0.0
    %149 = vmatprep.mubr.f32.mxu0 0.0
    %150 = vmatmul.mubr.f32.gmra.mrb[0].mxu0 %v67
    %v151 = vpop.f32.mrb[0].mxu0
    %v152 = vadd.f32 0.0, %v151
    %v153 = vpop.f32.mrb[0].mxu0
    %v154 = vadd.f32 0.0, %v153
    %155 = vmatprep.mubr.f32.mxu0 0.0
    %156 = vmatmul.mubr.f32.gmra.mrb[0].mxu0 %v70
    %v157 = vpop.f32.mrb[0].mxu0
    %v158 = vadd.f32 0.0, %v157
    %v159 = vpop.f32.mrb[0].mxu0
    %v160 = vadd.f32 0.0, %v159
    %161 = vdwg.mxu0
    %162 = vmatprep.subr.mxu0 %v48
    %163 = vmatpush1.msra.mxu0 %v47
    %164 = vmatprep.subr.mxu0 %v52
    %165 = vmatpush1.msra.mxu0 %v51
    %166 = vmatprep.subr.mxu0 %v56
    %167 = vmatpush1.msra.mxu0 %v55
    %168 = vmatprep.subr.mxu0 %v60
    %169 = vmatpush1.msra.mxu0 %v59
    %170 = vmatprep.subr.mxu0 %v83
    %171 = vmatpush1.msra.mxu0 %v80
    %172 = vmatprep.subr.mxu0 0.0
    %173 = vmatpush1.msra.mxu0 0.0
    %174 = vmatprep.subr.mxu0 0.0
    %175 = vmatpush1.msra.mxu0 0.0
    %176 = vmatprep.subr.mxu0 0.0
    %177 = vmatpush1.msra.mxu0 0.0
    %178 = vmatprep.subr.mxu0 0.0
    %179 = vmatpush1.msra.mxu0 0.0
    %180 = vmatprep.subr.mxu0 0.0
    %181 = vmatpush1.msra.mxu0 0.0
    %182 = vmatprep.subr.mxu0 0.0
    %183 = vmatpush1.msra.mxu0 0.0
    %184 = vmatprep.subr.mxu0 0.0
    %185 = vmatpush1.msra.mxu0 0.0
    %186 = vmatprep.subr.mxu0 0.0
    %187 = vmatpush1.msra.mxu0 0.0
    %188 = vmatprep.subr.mxu0 0.0
    %189 = vmatpush1.msra.mxu0 0.0
    %190 = vmatprep.subr.mxu0 0.0
    %191 = vmatpush1.msra.mxu0 0.0
    %192 = vmatprep.subr.mxu0 0.0
    %193 = vmatpush1.msra.mxu0 0.0
    %194 = vmatprep.subr.mxu0 0.0
    %195 = vmatpush1.msra.mxu0 0.0
    %196 = vmatprep.subr.mxu0 0.0
    %197 = vmatpush1.msra.mxu0 0.0
    %198 = vmatprep.subr.mxu0 0.0
    %199 = vmatpush1.msra.mxu0 0.0
    %200 = vmatprep.subr.mxu0 0.0
    %201 = vmatpush1.msra.mxu0 0.0
    %202 = vmatprep.subr.mxu0 0.0
    %203 = vmatpush1.msra.mxu0 0.0
    %204 = vmatprep.subr.mxu0 0.0
    %205 = vmatpush1.msra.mxu0 0.0
    %206 = vmatprep.subr.mxu0 0.0
    %207 = vmatpush1.msra.mxu0 0.0
    %208 = vmatprep.subr.mxu0 0.0
    %209 = vmatpush1.msra.mxu0 0.0
    %210 = vmatprep.subr.mxu0 0.0
    %211 = vmatpush1.msra.mxu0 0.0
    %212 = vmatprep.subr.mxu0 0.0
    %213 = vmatpush1.msra.mxu0 0.0
    %214 = vmatprep.subr.mxu0 0.0
    %215 = vmatpush1.msra.mxu0 0.0
    %216 = vmatprep.subr.mxu0 0.0
    %217 = vmatpush1.msra.mxu0 0.0
    %218 = vmatprep.subr.mxu0 0.0
    %219 = vmatpush1.msra.mxu0 0.0
    %220 = vmatprep.subr.mxu0 0.0
    %221 = vmatpush1.msra.mxu0 0.0
    %222 = vmatprep.subr.mxu0 0.0
    %223 = vmatpush1.msra.mxu0 0.0
    %224 = vmatprep.subr.mxu0 0.0
    %225 = vmatpush1.msra.mxu0 0.0
    %226 = vmatprep.mubr.f32.mxu0 0.0
    %227 = vmatmul.mubr.f32.gmra.mrb[0].mxu0 %v67
    %v228 = vpop.f32.mrb[0].mxu0
    %v229 = vadd.f32 0.0, %v228
    %v230 = vpop.f32.mrb[0].mxu0
    %v231 = vadd.f32 0.0, %v230
    %232 = vmatprep.mubr.f32.mxu0 0.0
    %233 = vmatmul.mubr.f32.gmra.mrb[0].mxu0 %v70
    %v234 = vpop.f32.mrb[0].mxu0
    %v235 = vadd.f32 0.0, %v234
    %v236 = vpop.f32.mrb[0].mxu0
    %v237 = vadd.f32 0.0, %v236
    %238 = vdwg.mxu0
    %v239 = vadd.f32 %v152, %v154
    %v240 = vadd.f32 %v239, %v229
    %v241 = vadd.f32 %v240, %v231
    %242 = vadd.xlane.f32.xlu0 %v241
    %v243 = vpop.xlane.xlu0 %242
    %v244 = vmul.f32 %v243, 0.001953125
    %v245 = vmul.f32 %v152, %v152
    %v246 = vmul.f32 %v154, %v154
    %v247 = vmul.f32 %v229, %v229
    %v248 = vmul.f32 %v231, %v231
    %v249 = vadd.f32 %v245, %v246
    %v250 = vadd.f32 %v249, %v247
    %v251 = vadd.f32 %v250, %v248
    %252 = vadd.xlane.f32.xlu0 %v251
    %v253 = vpop.xlane.xlu0 %252
    %v254 = vmul.f32 %v253, 0.001953125
    %v255 = vmul.f32 %v244, %v244
    %v256 = vsub.f32 %v254, %v255
    %v257 = vadd.f32 %v256, 1e-05
    %v258 = vrsqrt.pop %v257
    %v259 = vld [vmem:[%s2] sm:$0xff]
    %v260 = vmul.f32 %v259, %v258
    %v261 = vmul.f32 %v244, %v260
    %263 = vrot.lane.b32.xlu0 %v261, 1
    %v264 = vpop.permute.xlu0 %263
    %v266 = vsub.f32 %v259, %v264
    %268 = vset.pattern.permute.xlu0 0
    %269 = vperm.xlu0 %268, %v260
    %v270 = vpop.permute.xlu0 %269
    %v272 = vmul.f32 %v152, %v270
    %v273 = vmul.f32 %v154, %v270
    %v274 = vmul.f32 %v229, %v270
    %v275 = vmul.f32 %v231, %v270
    %277 = vset.pattern.permute.xlu0 1
    %278 = vperm.xlu0 %277, %v266
    %v279 = vpop.permute.xlu0 %278
    %v281 = vadd.f32 %v272, %v279
    %v282 = vadd.f32 %v273, %v279
    %v283 = vadd.f32 %v274, %v279
    %v284 = vadd.f32 %v275, %v279
    %v285 = vmax.f32 %v281, 0.0
    %v286 = vmax.f32 %v282, 0.0
    %v287 = vmax.f32 %v283, 0.0
    %v288 = vmax.f32 %v284, 0.0
    %290 = vset.pattern.permute.xlu0 2
    %291 = vperm.xlu0 %290, %v259
    %v292 = vpop.permute.xlu0 %291
    %v294 = vadd.f32 %v158, %v292
    %v295 = vadd.f32 %v160, %v292
    %v296 = vadd.f32 %v235, %v292
    %v297 = vadd.f32 %v237, %v292
    %v298 = vadd.f32 %v294, %v285
    %v299 = vadd.f32 %v295, %v286
    %v300 = vadd.f32 %v296, %v287
    %v301 = vadd.f32 %v297, %v288
    %302 = vst [vmem:[#allocation7] sm:$0xff] %v298
    %303 = vst [vmem:[#allocation7 + $0x8] sm:$0xff] %v299
    %304 = vst [vmem:[#allocation7 + $0x10] sm:$0xff] %v300
    %305 = vst [vmem:[#allocation7 + $0x18] sm:$0xff] %v301
    // Predicated region
    $region22: #{tpu_custom_call.1} parent=1 // pred_check
      _
    $region23: #{tpu_custom_call.1} parent=1 // pred_check_branch
      %307 = sbr.rel (0) target = $region25
    $region24: #{tpu_custom_call.1} parent=1 // pred_region
      %s309 = ssub.s32 512, 512
      %310 = vsyncadd [#allocation4], %s309
      %s312 = sshll.u32 [#allocation7], 4
      %s313 = int_to_ptr.vmem [resolvable:$true] %s312
      %315 = dma.vmem_to_hbm [thread:$0]  %s313, 512, %s3, [#allocation4]
    $region25: #{tpu_custom_call.1} parent=1 // pred_fallthru
      _
    // Predicated region
    $region26: #{tpu_custom_call.1} parent=1 // pred_check
      _
    $region27: #{tpu_custom_call.1} parent=1 // pred_check_branch
      %317 = sbr.rel (0) target = $region29
    $region28: #{tpu_custom_call.1} parent=1 // pred_region
      %318 = dma.done [#allocation4], 512
    $region29: #{tpu_custom_call.1} parent=1 // pred_fallthru
      _
    %319 = vsyncpa [#allocation3], 1
    %320 = vsyncpa [#allocation6], 1
    %321 = vsyncpa [#allocation4], 1

</llo_original>
